<compile_context>
chip_gen: v7x
topology: tpu7x:2x2x1
jax: 0.10.0
libtpu: 0.0.40
codegen_flags: <defaults>
</compile_context>

<pallas_src>
import functools

import jax
import jax.numpy as jnp
from jax.experimental import pallas as pl
from jax.experimental.pallas import tpu as pltpu

IN_DIM = 3 + 1          # state dim 3 + action_space 1
H1 = 200
H2 = 100
OUT_DIM = 1

# Padded (kernel) sizes.
IN_PAD = 8              # sublane-aligned input feature dim
H1_PAD = 256
H2_PAD = 128


def _round_up(x, m):
    return ((x + m - 1) // m) * m


def qnet_kernel(x_ref, w1_ref, b1_ref, w2_ref, b2_ref, w3_ref, b3_ref, out_ref):
    x = x_ref[...]                                                      # (IN_PAD, Bt)
    # affine1 + relu  (MXU: (256, 8) @ (8, Bt))
    h1 = jnp.dot(w1_ref[...], x, preferred_element_type=jnp.float32)   # (256, Bt)
    h1 = jnp.maximum(h1 + b1_ref[...], 0.0)
    # affine2 + relu  (MXU: (128, 256) @ (256, Bt))
    h2 = jnp.dot(w2_ref[...], h1, preferred_element_type=jnp.float32)  # (128, Bt)
    h2 = jnp.maximum(h2 + b2_ref[...], 0.0)
    # value head: single output row -> VPU multiply + sublane reduce (skip MXU)
    v = jnp.sum(w3_ref[...] * h2, axis=0, keepdims=True)               # (1, Bt)
    out_ref[...] = v + b3_ref[...]


def q_net_forward(x, kernel_params):
    """x: (B, IN_DIM) f32.  Returns (B, 1) f32, matching nn.Linear output."""
    w1k, b1k, w2k, b2k, w3k, b3k = kernel_params
    B = x.shape[0]

    # Batch tile: lane-dense (multiple of 128), capped so the f32 (256, Bt)
    # intermediate stays small enough not to blow vregs/VMEM.
    btile = min(512, _round_up(B, 128))
    b_pad = _round_up(B, btile)

    # Transpose + pad the batch stream in the JAX wrapper (layout plumbing).
    x_t = jnp.zeros((IN_PAD, b_pad), jnp.float32)
    x_t = x_t.at[:IN_DIM, :B].set(x.astype(jnp.float32).T)

    grid_spec = pltpu.PrefetchScalarGridSpec(
        num_scalar_prefetch=0,
        grid=(b_pad // btile,),
        in_specs=[
            pl.BlockSpec((IN_PAD, btile), lambda i: (0, i)),     # x tile (streams)
            pl.BlockSpec((H1_PAD, IN_PAD), lambda i: (0, 0)),    # w1 (resident)
            pl.BlockSpec((H1_PAD, 1), lambda i: (0, 0)),         # b1
            pl.BlockSpec((H2_PAD, H1_PAD), lambda i: (0, 0)),    # w2
            pl.BlockSpec((H2_PAD, 1), lambda i: (0, 0)),         # b2
            pl.BlockSpec((H2_PAD, 1), lambda i: (0, 0)),         # w3 (as column)
            pl.BlockSpec((1, 1), lambda i: (0, 0)),              # b3
        ],
        out_specs=pl.BlockSpec((1, btile), lambda i: (0, i)),    # lane-dense out
    )

    out_t = pl.pallas_call(
        qnet_kernel,
        out_shape=jax.ShapeDtypeStruct((1, b_pad), jnp.float32),
        grid_spec=grid_spec,
        compiler_params=pltpu.CompilerParams(
            dimension_semantics=("parallel",),
            vmem_limit_bytes=32 * 1024 * 1024,
        ),
    )(x_t, w1k, b1k, w2k, b2k, w3k, b3k)

    return out_t[:, :B].T                                        # (B, 1)


def init_params(key):
    """Logical (PyTorch-layout) params: W is (out_features, in_features)."""
    k1, k2, k3, k4, k5, k6 = jax.random.split(key, 6)

    def u(k, shape, fan_in):
        bound = 1.0 / jnp.sqrt(fan_in)
        return jax.random.uniform(k, shape, jnp.float32, -bound, bound)

    w1 = u(k1, (H1, IN_DIM), IN_DIM)
    b1 = u(k2, (H1,), IN_DIM)
    w2 = u(k3, (H2, H1), H1)
    b2 = u(k4, (H2,), H1)
    w3 = u(k5, (OUT_DIM, H2), H2)
    b3 = u(k6, (OUT_DIM,), H2)
    return (w1, b1, w2, b2, w3, b3)


def prepare_kernel_params(params):
    """Zero-pad logical params into the kernel's transposed, padded layout."""
    w1, b1, w2, b2, w3, b3 = params
    w1k = jnp.zeros((H1_PAD, IN_PAD), jnp.float32).at[:H1, :IN_DIM].set(w1)
    b1k = jnp.zeros((H1_PAD, 1), jnp.float32).at[:H1, 0].set(b1)
    w2k = jnp.zeros((H2_PAD, H1_PAD), jnp.float32).at[:H2, :H1].set(w2)
    b2k = jnp.zeros((H2_PAD, 1), jnp.float32).at[:H2, 0].set(b2)
    w3k = jnp.zeros((H2_PAD, 1), jnp.float32).at[:H2, 0].set(w3[0, :])
    b3k = b3.reshape(1, 1).astype(jnp.float32)
    return (w1k, b1k, w2k, b2k, w3k, b3k)


def q_net_ref(x, params):
    w1, b1, w2, b2, w3, b3 = params
    h1 = jnp.maximum(x @ w1.T + b1, 0.0)
    h2 = jnp.maximum(h1 @ w2.T + b2, 0.0)
    return h2 @ w3.T + b3


if __name__ == "__main__":
    key = jax.random.PRNGKey(0)
    kx, kp = jax.random.split(key)
    B = 8
    x = jax.random.normal(kx, (B, IN_DIM), jnp.float32)

    params = init_params(kp)
    kernel_params = prepare_kernel_params(params)

    out = q_net_forward(x, kernel_params)
    out = jax.block_until_ready(out)

    ref = q_net_ref(x, params)
    assert out.shape == (B, OUT_DIM), out.shape
    assert jnp.allclose(out, ref, atol=1e-5, rtol=1e-5), (
        float(jnp.max(jnp.abs(out - ref)))
    )
    print("KERNEL_OK")
</pallas_src>

<mosaic_0001>
module attributes {stable_mosaic.version = 11 : i64} {
  func.func @qnet_kernel(%arg0: i32, %arg1: memref<8x128xf32, #tpu.memory_space<vmem>>, %arg2: memref<256x8xf32, #tpu.memory_space<vmem>>, %arg3: memref<256x1xf32, #tpu.memory_space<vmem>>, %arg4: memref<128x256xf32, #tpu.memory_space<vmem>>, %arg5: memref<128x1xf32, #tpu.memory_space<vmem>>, %arg6: memref<128x1xf32, #tpu.memory_space<vmem>>, %arg7: memref<1x1xf32, #tpu.memory_space<vmem>>, %arg8: memref<1x128xf32, #tpu.memory_space<vmem>>) attributes {dimension_semantics = [#tpu.dimension_semantics<parallel>], iteration_bounds = array<i64: 1>, scalar_prefetch = 0 : i64, scratch_operands = 0 : i64, tpu.core_type = #tpu.core_type<tc>, window_params = [{transform_indices = @transform_0, window_bounds = array<i64: 8, 128>}, {pipeline_mode = #tpu.pipeline_mode<synchronous>, transform_indices = @transform_1, window_bounds = array<i64: 256, 8>}, {pipeline_mode = #tpu.pipeline_mode<synchronous>, transform_indices = @transform_2, window_bounds = array<i64: 256, 1>}, {pipeline_mode = #tpu.pipeline_mode<synchronous>, transform_indices = @transform_3, window_bounds = array<i64: 128, 256>}, {pipeline_mode = #tpu.pipeline_mode<synchronous>, transform_indices = @transform_4, window_bounds = array<i64: 128, 1>}, {pipeline_mode = #tpu.pipeline_mode<synchronous>, transform_indices = @transform_5, window_bounds = array<i64: 128, 1>}, {pipeline_mode = #tpu.pipeline_mode<synchronous>, transform_indices = @transform_6, window_bounds = array<i64: 1, 1>}, {transform_indices = @transform_7, window_bounds = array<i64: 1, 128>}]} {
    %c0 = arith.constant 0 : index
    %c0_0 = arith.constant 0 : index
    %0 = vector.load %arg1[%c0, %c0_0] : memref<8x128xf32, #tpu.memory_space<vmem>>, vector<8x128xf32>
    %c0_1 = arith.constant 0 : index
    %c0_2 = arith.constant 0 : index
    %1 = vector.load %arg2[%c0_1, %c0_2] : memref<256x8xf32, #tpu.memory_space<vmem>>, vector<256x8xf32>
    %cst = arith.constant dense<0.000000e+00> : vector<256x128xf32>
    %2 = tpu.matmul %1, %0, %cst {dimension_numbers = #tpu.dot_dimension_numbers<[1], [0], [0], [1], [0, 0, 1, 1], [], []>} : vector<256x8xf32>, vector<8x128xf32>, vector<256x128xf32> -> vector<256x128xf32>
    %c0_3 = arith.constant 0 : index
    %c0_4 = arith.constant 0 : index
    %3 = vector.load %arg3[%c0_3, %c0_4] : memref<256x1xf32, #tpu.memory_space<vmem>>, vector<256x1xf32>
    %4 = vector.broadcast %3 : vector<256x1xf32> to vector<256x128xf32>
    %5 = arith.addf %2, %4 : vector<256x128xf32>
    %cst_5 = arith.constant 0.000000e+00 : f32
    %6 = vector.broadcast %cst_5 : f32 to vector<256x128xf32>
    %7 = arith.maximumf %5, %6 : vector<256x128xf32>
    %c0_6 = arith.constant 0 : index
    %c0_7 = arith.constant 0 : index
    %8 = vector.load %arg4[%c0_6, %c0_7] : memref<128x256xf32, #tpu.memory_space<vmem>>, vector<128x256xf32>
    %cst_8 = arith.constant dense<0.000000e+00> : vector<128x128xf32>
    %9 = tpu.matmul %8, %7, %cst_8 {dimension_numbers = #tpu.dot_dimension_numbers<[1], [0], [0], [1], [0, 0, 1, 1], [], []>} : vector<128x256xf32>, vector<256x128xf32>, vector<128x128xf32> -> vector<128x128xf32>
    %c0_9 = arith.constant 0 : index
    %c0_10 = arith.constant 0 : index
    %10 = vector.load %arg5[%c0_9, %c0_10] : memref<128x1xf32, #tpu.memory_space<vmem>>, vector<128x1xf32>
    %11 = vector.broadcast %10 : vector<128x1xf32> to vector<128x128xf32>
    %12 = arith.addf %9, %11 : vector<128x128xf32>
    %cst_11 = arith.constant 0.000000e+00 : f32
    %13 = vector.broadcast %cst_11 : f32 to vector<128x128xf32>
    %14 = arith.maximumf %12, %13 : vector<128x128xf32>
    %c0_12 = arith.constant 0 : index
    %c0_13 = arith.constant 0 : index
    %15 = vector.load %arg6[%c0_12, %c0_13] : memref<128x1xf32, #tpu.memory_space<vmem>>, vector<128x1xf32>
    %16 = vector.broadcast %15 : vector<128x1xf32> to vector<128x128xf32>
    %17 = arith.mulf %16, %14 : vector<128x128xf32>
    %cst_14 = arith.constant dense<0.000000e+00> : vector<128xf32>
    %18 = vector.multi_reduction <add>, %17, %cst_14 [0] : vector<128x128xf32> to vector<128xf32>
    %19 = vector.shape_cast %18 : vector<128xf32> to vector<1x128xf32>
    %c0_15 = arith.constant 0 : index
    %c0_16 = arith.constant 0 : index
    %20 = vector.load %arg7[%c0_15, %c0_16] : memref<1x1xf32, #tpu.memory_space<vmem>>, vector<1x1xf32>
    %21 = vector.broadcast %20 : vector<1x1xf32> to vector<1x128xf32>
    %22 = arith.addf %19, %21 : vector<1x128xf32>
    %c0_17 = arith.constant 0 : index
    %c0_18 = arith.constant 0 : index
    %23 = vector.load %arg8[%c0_17, %c0_18] : memref<1x128xf32, #tpu.memory_space<vmem>>, vector<1x128xf32>
    tpu.vector_store %arg8[%c0_17, %c0_18], %22 {strides = array<i32>} : memref<1x128xf32, #tpu.memory_space<vmem>>, vector<1x128xf32>,
    return
  }
  func.func @transform_0(%arg0: i32) -> (i32, i32) {
    %c0_i32 = arith.constant 0 : i32
    %c0_i32_0 = arith.constant 0 : i32
    return %c0_i32, %arg0 : i32, i32
  }
  func.func @transform_1(%arg0: i32) -> (i32, i32) {
    %c0_i32 = arith.constant 0 : i32
    %c0_i32_0 = arith.constant 0 : i32
    %c0_i32_1 = arith.constant 0 : i32
    return %c0_i32, %c0_i32_0 : i32, i32
  }
  func.func @transform_2(%arg0: i32) -> (i32, i32) {
    %c0_i32 = arith.constant 0 : i32
    %c0_i32_0 = arith.constant 0 : i32
    %c0_i32_1 = arith.constant 0 : i32
    return %c0_i32, %c0_i32_0 : i32, i32
  }
  func.func @transform_3(%arg0: i32) -> (i32, i32) {
    %c0_i32 = arith.constant 0 : i32
    %c0_i32_0 = arith.constant 0 : i32
    %c0_i32_1 = arith.constant 0 : i32
    return %c0_i32, %c0_i32_0 : i32, i32
  }
  func.func @transform_4(%arg0: i32) -> (i32, i32) {
    %c0_i32 = arith.constant 0 : i32
    %c0_i32_0 = arith.constant 0 : i32
    %c0_i32_1 = arith.constant 0 : i32
    return %c0_i32, %c0_i32_0 : i32, i32
  }
  func.func @transform_5(%arg0: i32) -> (i32, i32) {
    %c0_i32 = arith.constant 0 : i32
    %c0_i32_0 = arith.constant 0 : i32
    %c0_i32_1 = arith.constant 0 : i32
    return %c0_i32, %c0_i32_0 : i32, i32
  }
  func.func @transform_6(%arg0: i32) -> (i32, i32) {
    %c0_i32 = arith.constant 0 : i32
    %c0_i32_0 = arith.constant 0 : i32
    %c0_i32_1 = arith.constant 0 : i32
    return %c0_i32, %c0_i32_0 : i32, i32
  }
  func.func @transform_7(%arg0: i32) -> (i32, i32) {
    %c0_i32 = arith.constant 0 : i32
    %c0_i32_0 = arith.constant 0 : i32
    return %c0_i32, %arg0 : i32, i32
  }
}

</mosaic_0001>

<llo_original>
// kernel: tpu_custom_call.1
$region0: #{tpu_custom_call.1}
  #allocation0 [shape = 'u32[]', space=smem, size = 0x4, offset = 0x4, fixed_abs, tag = 'smem constant byte address 0x4 - core index']
  #allocation1 [shape = 'u32[144,128]{1,0:T(1,128)}', space=vmem, size = 0x12000, scoped, tag = 'internal scratch']
  #allocation2 [shape = 'f32[1,1]{1,0:T(1,128)S(1)}', space=vmem, size = 0x200, scoped, tag = 'scoped memory for tpu_custom_call.1']
  %s0 = inlined_call_operand.vmem [shape: f32[8,128], index: 0, kind: input, shape index: {}]
  %s1 = inlined_call_operand.vmem [shape: f32[256,8], index: 1, kind: input, shape index: {}]
  %s2 = inlined_call_operand.vmem [shape: f32[256,1], index: 2, kind: input, shape index: {}]
  %s3 = inlined_call_operand.vmem [shape: f32[128,256], index: 3, kind: input, shape index: {}]
  %s4 = inlined_call_operand.vmem [shape: f32[128,1], index: 4, kind: input, shape index: {}]
  %s5 = inlined_call_operand.vmem [shape: f32[128,1], index: 5, kind: input, shape index: {}]
  %s6 = inlined_call_operand.<no memory space> [shape: f32[1,1], index: 6, kind: input, shape index: {}]
  %s7 = inlined_call_operand.hbm [shape: f32[1,128], index: 7, kind: output, shape index: {}]
  %s8 = sld [smem:[#allocation0]]
  $region38: #{tpu_custom_call.1} parent=0
    _
  %s10 = ssub.s32 1, %s8
  %s11 = scalar_select 0, %s10, %s8
  %v12 = vstv %s6
  %13 = vst [vmem:[#allocation2] sm:$0x1] %v12
  $region1: #{tpu_custom_call.1} parent=0
    #allocation3 [shape = 'u8[512]{0}', space=vmem, size = 0x400, scoped, tag = 'output window, operand 0, single buffered']
    #allocation4 [shape = 's32[1]{0}', space=sflag, size = 0x4, scoped, tag = 'scoped memory for tpu_custom_call.1']
    %14 = vsyncpa [#allocation4], 0
    // Predicated region
    $region2: #{tpu_custom_call.1} parent=1 // pred_check
      _
    $region3: #{tpu_custom_call.1} parent=1 // pred_check_branch
      %16 = sbr.rel (0) target = $region5
    $region4: #{tpu_custom_call.1} parent=1 // pred_region
      _
    $region5: #{tpu_custom_call.1} parent=1 // pred_fallthru
      _
    // Predicated region
    $region6: #{tpu_custom_call.1} parent=1 // pred_check
      _
    $region7: #{tpu_custom_call.1} parent=1 // pred_check_branch
      %18 = sbr.rel (0) target = $region9
    $region8: #{tpu_custom_call.1} parent=1 // pred_region
      _
    $region9: #{tpu_custom_call.1} parent=1 // pred_fallthru
      _
    // Predicated region
    $region10: #{tpu_custom_call.1} parent=1 // pred_check
      _
    $region11: #{tpu_custom_call.1} parent=1 // pred_check_branch
      %20 = sbr.rel (0) target = $region13
    $region12: #{tpu_custom_call.1} parent=1 // pred_region
      _
    $region13: #{tpu_custom_call.1} parent=1 // pred_fallthru
      _
    // Predicated region
    $region14: #{tpu_custom_call.1} parent=1 // pred_check
      _
    $region15: #{tpu_custom_call.1} parent=1 // pred_check_branch
      %22 = sbr.rel (0) target = $region17
    $region16: #{tpu_custom_call.1} parent=1 // pred_region
      _
    $region17: #{tpu_custom_call.1} parent=1 // pred_fallthru
      _
    // Predicated region
    $region18: #{tpu_custom_call.1} parent=1 // pred_check
      _
    $region19: #{tpu_custom_call.1} parent=1 // pred_check_branch
      %24 = sbr.rel (0) target = $region21
    $region20: #{tpu_custom_call.1} parent=1 // pred_region
      _
    $region21: #{tpu_custom_call.1} parent=1 // pred_fallthru
      _
    // Predicated region
    $region22: #{tpu_custom_call.1} parent=1 // pred_check
      _
    $region23: #{tpu_custom_call.1} parent=1 // pred_check_branch
      %26 = sbr.rel (0) target = $region25
    $region24: #{tpu_custom_call.1} parent=1 // pred_region
      _
    $region25: #{tpu_custom_call.1} parent=1 // pred_fallthru
      _
    // Predicated region
    $region26: #{tpu_custom_call.1} parent=1 // pred_check
      _
    $region27: #{tpu_custom_call.1} parent=1 // pred_check_branch
      %28 = sbr.rel (0) target = $region29
    $region28: #{tpu_custom_call.1} parent=1 // pred_region
      _
    $region29: #{tpu_custom_call.1} parent=1 // pred_fallthru
      _
    %v29 = vld [vmem:[%s0] sm:$0xff]
    %v30 = vld [vmem:[%s1] sm:$0xff]
    %v31 = vld [vmem:[%s1 + $0x8] sm:$0xff]
    %v32 = vld [vmem:[%s1 + $0x10] sm:$0xff]
    %v33 = vld [vmem:[%s1 + $0x18] sm:$0xff]
    %v34 = vld [vmem:[%s1 + $0x20] sm:$0xff]
    %v35 = vld [vmem:[%s1 + $0x28] sm:$0xff]
    %v36 = vld [vmem:[%s1 + $0x30] sm:$0xff]
    %v37 = vld [vmem:[%s1 + $0x38] sm:$0xff]
    %v38 = vld [vmem:[%s1 + $0x40] sm:$0xff]
    %v39 = vld [vmem:[%s1 + $0x48] sm:$0xff]
    %v40 = vld [vmem:[%s1 + $0x50] sm:$0xff]
    %v41 = vld [vmem:[%s1 + $0x58] sm:$0xff]
    %v42 = vld [vmem:[%s1 + $0x60] sm:$0xff]
    %v43 = vld [vmem:[%s1 + $0x68] sm:$0xff]
    %v44 = vld [vmem:[%s1 + $0x70] sm:$0xff]
    %v45 = vld [vmem:[%s1 + $0x78] sm:$0xff]
    %v46 = vld [vmem:[%s1 + $0x80] sm:$0xff]
    %v47 = vld [vmem:[%s1 + $0x88] sm:$0xff]
    %v48 = vld [vmem:[%s1 + $0x90] sm:$0xff]
    %v49 = vld [vmem:[%s1 + $0x98] sm:$0xff]
    %v50 = vld [vmem:[%s1 + $0xa0] sm:$0xff]
    %v51 = vld [vmem:[%s1 + $0xa8] sm:$0xff]
    %v52 = vld [vmem:[%s1 + $0xb0] sm:$0xff]
    %v53 = vld [vmem:[%s1 + $0xb8] sm:$0xff]
    %v54 = vld [vmem:[%s1 + $0xc0] sm:$0xff]
    %v55 = vld [vmem:[%s1 + $0xc8] sm:$0xff]
    %v56 = vld [vmem:[%s1 + $0xd0] sm:$0xff]
    %v57 = vld [vmem:[%s1 + $0xd8] sm:$0xff]
    %v58 = vld [vmem:[%s1 + $0xe0] sm:$0xff]
    %v59 = vld [vmem:[%s1 + $0xe8] sm:$0xff]
    %v60 = vld [vmem:[%s1 + $0xf0] sm:$0xff]
    %v61 = vld [vmem:[%s1 + $0xf8] sm:$0xff]
    %v62 = vld [vmem:[%s2] sm:$0xff]
    %v63 = vld [vmem:[%s2 + $0x8] sm:$0xff]
    %v64 = vld [vmem:[%s2 + $0x10] sm:$0xff]
    %v65 = vld [vmem:[%s2 + $0x18] sm:$0xff]
    %v66 = vld [vmem:[%s2 + $0x20] sm:$0xff]
    %v67 = vld [vmem:[%s2 + $0x28] sm:$0xff]
    %v68 = vld [vmem:[%s2 + $0x30] sm:$0xff]
    %v69 = vld [vmem:[%s2 + $0x38] sm:$0xff]
    %v70 = vld [vmem:[%s2 + $0x40] sm:$0xff]
    %v71 = vld [vmem:[%s2 + $0x48] sm:$0xff]
    %v72 = vld [vmem:[%s2 + $0x50] sm:$0xff]
    %v73 = vld [vmem:[%s2 + $0x58] sm:$0xff]
    %v74 = vld [vmem:[%s2 + $0x60] sm:$0xff]
    %v75 = vld [vmem:[%s2 + $0x68] sm:$0xff]
    %v76 = vld [vmem:[%s2 + $0x70] sm:$0xff]
    %v77 = vld [vmem:[%s2 + $0x78] sm:$0xff]
    %v78 = vld [vmem:[%s2 + $0x80] sm:$0xff]
    %v79 = vld [vmem:[%s2 + $0x88] sm:$0xff]
    %v80 = vld [vmem:[%s2 + $0x90] sm:$0xff]
    %v81 = vld [vmem:[%s2 + $0x98] sm:$0xff]
    %v82 = vld [vmem:[%s2 + $0xa0] sm:$0xff]
    %v83 = vld [vmem:[%s2 + $0xa8] sm:$0xff]
    %v84 = vld [vmem:[%s2 + $0xb0] sm:$0xff]
    %v85 = vld [vmem:[%s2 + $0xb8] sm:$0xff]
    %v86 = vld [vmem:[%s2 + $0xc0] sm:$0xff]
    %v87 = vld [vmem:[%s2 + $0xc8] sm:$0xff]
    %v88 = vld [vmem:[%s2 + $0xd0] sm:$0xff]
    %v89 = vld [vmem:[%s2 + $0xd8] sm:$0xff]
    %v90 = vld [vmem:[%s2 + $0xe0] sm:$0xff]
    %v91 = vld [vmem:[%s2 + $0xe8] sm:$0xff]
    %v92 = vld [vmem:[%s2 + $0xf0] sm:$0xff]
    %v93 = vld [vmem:[%s2 + $0xf8] sm:$0xff]
    %95 = vset.pattern.permute.xlu0 0
    %96 = vperm.xlu0 %95, %v62
    %v97 = vpop.permute.xlu0 %96
    %100 = vset.pattern.permute.xlu0 0
    %101 = vperm.xlu0 %100, %v63
    %v102 = vpop.permute.xlu0 %101
    %105 = vset.pattern.permute.xlu0 0
    %106 = vperm.xlu0 %105, %v64
    %v107 = vpop.permute.xlu0 %106
    %110 = vset.pattern.permute.xlu0 0
    %111 = vperm.xlu0 %110, %v65
    %v112 = vpop.permute.xlu0 %111
    %115 = vset.pattern.permute.xlu0 0
    %116 = vperm.xlu0 %115, %v66
    %v117 = vpop.permute.xlu0 %116
    %120 = vset.pattern.permute.xlu0 0
    %121 = vperm.xlu0 %120, %v67
    %v122 = vpop.permute.xlu0 %121
    %125 = vset.pattern.permute.xlu0 0
    %126 = vperm.xlu0 %125, %v68
    %v127 = vpop.permute.xlu0 %126
    %130 = vset.pattern.permute.xlu0 0
    %131 = vperm.xlu0 %130, %v69
    %v132 = vpop.permute.xlu0 %131
    %135 = vset.pattern.permute.xlu0 0
    %136 = vperm.xlu0 %135, %v70
    %v137 = vpop.permute.xlu0 %136
    %140 = vset.pattern.permute.xlu0 0
    %141 = vperm.xlu0 %140, %v71
    %v142 = vpop.permute.xlu0 %141
    %145 = vset.pattern.permute.xlu0 0
    %146 = vperm.xlu0 %145, %v72
    %v147 = vpop.permute.xlu0 %146
    %150 = vset.pattern.permute.xlu0 0
    %151 = vperm.xlu0 %150, %v73
    %v152 = vpop.permute.xlu0 %151
    %155 = vset.pattern.permute.xlu0 0
    %156 = vperm.xlu0 %155, %v74
    %v157 = vpop.permute.xlu0 %156
    %160 = vset.pattern.permute.xlu0 0
    %161 = vperm.xlu0 %160, %v75
    %v162 = vpop.permute.xlu0 %161
    %165 = vset.pattern.permute.xlu0 0
    %166 = vperm.xlu0 %165, %v76
    %v167 = vpop.permute.xlu0 %166
    %170 = vset.pattern.permute.xlu0 0
    %171 = vperm.xlu0 %170, %v77
    %v172 = vpop.permute.xlu0 %171
    %175 = vset.pattern.permute.xlu0 0
    %176 = vperm.xlu0 %175, %v78
    %v177 = vpop.permute.xlu0 %176
    %180 = vset.pattern.permute.xlu0 0
    %181 = vperm.xlu0 %180, %v79
    %v182 = vpop.permute.xlu0 %181
    %185 = vset.pattern.permute.xlu0 0
    %186 = vperm.xlu0 %185, %v80
    %v187 = vpop.permute.xlu0 %186
    %190 = vset.pattern.permute.xlu0 0
    %191 = vperm.xlu0 %190, %v81
    %v192 = vpop.permute.xlu0 %191
    %195 = vset.pattern.permute.xlu0 0
    %196 = vperm.xlu0 %195, %v82
    %v197 = vpop.permute.xlu0 %196
    %200 = vset.pattern.permute.xlu0 0
    %201 = vperm.xlu0 %200, %v83
    %v202 = vpop.permute.xlu0 %201
    %205 = vset.pattern.permute.xlu0 0
    %206 = vperm.xlu0 %205, %v84
    %v207 = vpop.permute.xlu0 %206
    %210 = vset.pattern.permute.xlu0 0
    %211 = vperm.xlu0 %210, %v85
    %v212 = vpop.permute.xlu0 %211
    %215 = vset.pattern.permute.xlu0 0
    %216 = vperm.xlu0 %215, %v86
    %v217 = vpop.permute.xlu0 %216
    %220 = vset.pattern.permute.xlu0 0
    %221 = vperm.xlu0 %220, %v87
    %v222 = vpop.permute.xlu0 %221
    %225 = vset.pattern.permute.xlu0 0
    %226 = vperm.xlu0 %225, %v88
    %v227 = vpop.permute.xlu0 %226
    %230 = vset.pattern.permute.xlu0 0
    %231 = vperm.xlu0 %230, %v89
    %v232 = vpop.permute.xlu0 %231
    %235 = vset.pattern.permute.xlu0 0
    %236 = vperm.xlu0 %235, %v90
    %v237 = vpop.permute.xlu0 %236
    %240 = vset.pattern.permute.xlu0 0
    %241 = vperm.xlu0 %240, %v91
    %v242 = vpop.permute.xlu0 %241
    %245 = vset.pattern.permute.xlu0 0
    %246 = vperm.xlu0 %245, %v92
    %v247 = vpop.permute.xlu0 %246
    %250 = vset.pattern.permute.xlu0 0
    %251 = vperm.xlu0 %250, %v93
    %v252 = vpop.permute.xlu0 %251
    %vm254 = vcmask 64512
    %v256 = vsel %vm254, %v30, 0
    %v259 = vsel %vm254, %v31, 0
    %v262 = vsel %vm254, %v32, 0
    %v265 = vsel %vm254, %v33, 0
    %v268 = vsel %vm254, %v34, 0
    %v271 = vsel %vm254, %v35, 0
    %v274 = vsel %vm254, %v36, 0
    %v277 = vsel %vm254, %v37, 0
    %v280 = vsel %vm254, %v38, 0
    %v283 = vsel %vm254, %v39, 0
    %v286 = vsel %vm254, %v40, 0
    %v289 = vsel %vm254, %v41, 0
    %v292 = vsel %vm254, %v42, 0
    %v295 = vsel %vm254, %v43, 0
    %v298 = vsel %vm254, %v44, 0
    %v301 = vsel %vm254, %v45, 0
    %v304 = vsel %vm254, %v46, 0
    %v307 = vsel %vm254, %v47, 0
    %v310 = vsel %vm254, %v48, 0
    %v313 = vsel %vm254, %v49, 0
    %v316 = vsel %vm254, %v50, 0
    %v319 = vsel %vm254, %v51, 0
    %v322 = vsel %vm254, %v52, 0
    %v325 = vsel %vm254, %v53, 0
    %v328 = vsel %vm254, %v54, 0
    %v331 = vsel %vm254, %v55, 0
    %v334 = vsel %vm254, %v56, 0
    %v337 = vsel %vm254, %v57, 0
    %v340 = vsel %vm254, %v58, 0
    %v343 = vsel %vm254, %v59, 0
    %v346 = vsel %vm254, %v60, 0
    %v349 = vsel %vm254, %v61, 0
    %351 = vmatprep.subr.mxu0 0.0
    %352 = vmatpush1.msra.mxu0 %v29
    %353 = vmatprep.subr.mxu0 0.0
    %354 = vmatpush1.msra.mxu0 0.0
    %355 = vmatprep.subr.mxu0 0.0
    %356 = vmatpush1.msra.mxu0 0.0
    %357 = vmatprep.subr.mxu0 0.0
    %358 = vmatpush1.msra.mxu0 0.0
    %359 = vmatprep.subr.mxu0 0.0
    %360 = vmatpush1.msra.mxu0 0.0
    %361 = vmatprep.subr.mxu0 0.0
    %362 = vmatpush1.msra.mxu0 0.0
    %363 = vmatprep.subr.mxu0 0.0
    %364 = vmatpush1.msra.mxu0 0.0
    %365 = vmatprep.subr.mxu0 0.0
    %366 = vmatpush1.msra.mxu0 0.0
    %367 = vmatprep.subr.mxu0 0.0
    %368 = vmatpush1.msra.mxu0 0.0
    %369 = vmatprep.subr.mxu0 0.0
    %370 = vmatpush1.msra.mxu0 0.0
    %371 = vmatprep.subr.mxu0 0.0
    %372 = vmatpush1.msra.mxu0 0.0
    %373 = vmatprep.subr.mxu0 0.0
    %374 = vmatpush1.msra.mxu0 0.0
    %375 = vmatprep.subr.mxu0 0.0
    %376 = vmatpush1.msra.mxu0 0.0
    %377 = vmatprep.subr.mxu0 0.0
    %378 = vmatpush1.msra.mxu0 0.0
    %379 = vmatprep.subr.mxu0 0.0
    %380 = vmatpush1.msra.mxu0 0.0
    %381 = vmatprep.subr.mxu0 0.0
    %382 = vmatpush1.msra.mxu0 0.0
    %383 = vmatprep.subr.mxu0 0.0
    %384 = vmatpush1.msra.mxu0 0.0
    %385 = vmatprep.subr.mxu0 0.0
    %386 = vmatpush1.msra.mxu0 0.0
    %387 = vmatprep.subr.mxu0 0.0
    %388 = vmatpush1.msra.mxu0 0.0
    %389 = vmatprep.subr.mxu0 0.0
    %390 = vmatpush1.msra.mxu0 0.0
    %391 = vmatprep.subr.mxu0 0.0
    %392 = vmatpush1.msra.mxu0 0.0
    %393 = vmatprep.subr.mxu0 0.0
    %394 = vmatpush1.msra.mxu0 0.0
    %395 = vmatprep.subr.mxu0 0.0
    %396 = vmatpush1.msra.mxu0 0.0
    %397 = vmatprep.subr.mxu0 0.0
    %398 = vmatpush1.msra.mxu0 0.0
    %399 = vmatprep.subr.mxu0 0.0
    %400 = vmatpush1.msra.mxu0 0.0
    %401 = vmatprep.subr.mxu0 0.0
    %402 = vmatpush1.msra.mxu0 0.0
    %403 = vmatprep.subr.mxu0 0.0
    %404 = vmatpush1.msra.mxu0 0.0
    %405 = vmatprep.subr.mxu0 0.0
    %406 = vmatpush1.msra.mxu0 0.0
    %407 = vmatprep.subr.mxu0 0.0
    %408 = vmatpush1.msra.mxu0 0.0
    %409 = vmatprep.subr.mxu0 0.0
    %410 = vmatpush1.msra.mxu0 0.0
    %411 = vmatprep.subr.mxu0 0.0
    %412 = vmatpush1.msra.mxu0 0.0
    %413 = vmatprep.subr.mxu0 0.0
    %414 = vmatpush1.msra.mxu0 0.0
    %415 = vmatprep.mubr.f32.mxu0 0.0
    %416 = vmatmul.mubr.f32.gmra.mrb[0].mxu0 %v256
    %v417 = vpop.f32.mrb[0].mxu0
    %v418 = vadd.f32 %v97, %v417
    %v419 = vpop.f32.mrb[0].mxu0
    %420 = vmatprep.mubr.f32.mxu0 0.0
    %421 = vmatmul.mubr.f32.gmra.mrb[0].mxu0 %v259
    %v422 = vpop.f32.mrb[0].mxu0
    %v423 = vadd.f32 %v102, %v422
    %v424 = vpop.f32.mrb[0].mxu0
    %425 = vmatprep.mubr.f32.mxu0 0.0
    %426 = vmatmul.mubr.f32.gmra.mrb[0].mxu0 %v262
    %v427 = vpop.f32.mrb[0].mxu0
    %v428 = vadd.f32 %v107, %v427
    %v429 = vpop.f32.mrb[0].mxu0
    %430 = vmatprep.mubr.f32.mxu0 0.0
    %431 = vmatmul.mubr.f32.gmra.mrb[0].mxu0 %v265
    %v432 = vpop.f32.mrb[0].mxu0
    %v433 = vadd.f32 %v112, %v432
    %v434 = vpop.f32.mrb[0].mxu0
    %435 = vmatprep.mubr.f32.mxu0 0.0
    %436 = vmatmul.mubr.f32.gmra.mrb[0].mxu0 %v268
    %v437 = vpop.f32.mrb[0].mxu0
    %v438 = vadd.f32 %v117, %v437
    %v439 = vpop.f32.mrb[0].mxu0
    %440 = vmatprep.mubr.f32.mxu0 0.0
    %441 = vmatmul.mubr.f32.gmra.mrb[0].mxu0 %v271
    %v442 = vpop.f32.mrb[0].mxu0
    %v443 = vadd.f32 %v122, %v442
    %v444 = vpop.f32.mrb[0].mxu0
    %445 = vmatprep.mubr.f32.mxu0 0.0
    %446 = vmatmul.mubr.f32.gmra.mrb[0].mxu0 %v274
    %v447 = vpop.f32.mrb[0].mxu0
    %v448 = vadd.f32 %v127, %v447
    %v449 = vpop.f32.mrb[0].mxu0
    %450 = vmatprep.mubr.f32.mxu0 0.0
    %451 = vmatmul.mubr.f32.gmra.mrb[0].mxu0 %v277
    %v452 = vpop.f32.mrb[0].mxu0
    %v453 = vadd.f32 %v132, %v452
    %v454 = vpop.f32.mrb[0].mxu0
    %455 = vmatprep.mubr.f32.mxu0 0.0
    %456 = vmatmul.mubr.f32.gmra.mrb[0].mxu0 %v280
    %v457 = vpop.f32.mrb[0].mxu0
    %v458 = vadd.f32 %v137, %v457
    %v459 = vpop.f32.mrb[0].mxu0
    %460 = vmatprep.mubr.f32.mxu0 0.0
    %461 = vmatmul.mubr.f32.gmra.mrb[0].mxu0 %v283
    %v462 = vpop.f32.mrb[0].mxu0
    %v463 = vadd.f32 %v142, %v462
    %v464 = vpop.f32.mrb[0].mxu0
    %465 = vmatprep.mubr.f32.mxu0 0.0
    %466 = vmatmul.mubr.f32.gmra.mrb[0].mxu0 %v286
    %v467 = vpop.f32.mrb[0].mxu0
    %v468 = vadd.f32 %v147, %v467
    %v469 = vpop.f32.mrb[0].mxu0
    %470 = vmatprep.mubr.f32.mxu0 0.0
    %471 = vmatmul.mubr.f32.gmra.mrb[0].mxu0 %v289
    %v472 = vpop.f32.mrb[0].mxu0
    %v473 = vadd.f32 %v152, %v472
    %v474 = vpop.f32.mrb[0].mxu0
    %475 = vmatprep.mubr.f32.mxu0 0.0
    %476 = vmatmul.mubr.f32.gmra.mrb[0].mxu0 %v292
    %v477 = vpop.f32.mrb[0].mxu0
    %v478 = vadd.f32 %v157, %v477
    %v479 = vpop.f32.mrb[0].mxu0
    %480 = vmatprep.mubr.f32.mxu0 0.0
    %481 = vmatmul.mubr.f32.gmra.mrb[0].mxu0 %v295
    %v482 = vpop.f32.mrb[0].mxu0
    %v483 = vadd.f32 %v162, %v482
    %v484 = vpop.f32.mrb[0].mxu0
    %485 = vmatprep.mubr.f32.mxu0 0.0
    %486 = vmatmul.mubr.f32.gmra.mrb[0].mxu0 %v298
    %v487 = vpop.f32.mrb[0].mxu0
    %v488 = vadd.f32 %v167, %v487
    %v489 = vpop.f32.mrb[0].mxu0
    %490 = vmatprep.mubr.f32.mxu0 0.0
    %491 = vmatmul.mubr.f32.gmra.mrb[0].mxu0 %v301
    %v492 = vpop.f32.mrb[0].mxu0
    %v493 = vadd.f32 %v172, %v492
    %v494 = vpop.f32.mrb[0].mxu0
    %495 = vmatprep.mubr.f32.mxu0 0.0
    %496 = vmatmul.mubr.f32.gmra.mrb[0].mxu0 %v304
    %v497 = vpop.f32.mrb[0].mxu0
    %v498 = vadd.f32 %v177, %v497
    %v499 = vpop.f32.mrb[0].mxu0
    %500 = vmatprep.mubr.f32.mxu0 0.0
    %501 = vmatmul.mubr.f32.gmra.mrb[0].mxu0 %v307
    %v502 = vpop.f32.mrb[0].mxu0
    %v503 = vadd.f32 %v182, %v502
    %v504 = vpop.f32.mrb[0].mxu0
    %505 = vmatprep.mubr.f32.mxu0 0.0
    %506 = vmatmul.mubr.f32.gmra.mrb[0].mxu0 %v310
    %v507 = vpop.f32.mrb[0].mxu0
    %v508 = vadd.f32 %v187, %v507
    %v509 = vpop.f32.mrb[0].mxu0
    %510 = vmatprep.mubr.f32.mxu0 0.0
    %511 = vmatmul.mubr.f32.gmra.mrb[0].mxu0 %v313
    %v512 = vpop.f32.mrb[0].mxu0
    %v513 = vadd.f32 %v192, %v512
    %v514 = vpop.f32.mrb[0].mxu0
    %515 = vmatprep.mubr.f32.mxu0 0.0
    %516 = vmatmul.mubr.f32.gmra.mrb[0].mxu0 %v316
    %v517 = vpop.f32.mrb[0].mxu0
    %v518 = vadd.f32 %v197, %v517
    %v519 = vpop.f32.mrb[0].mxu0
    %520 = vmatprep.mubr.f32.mxu0 0.0
    %521 = vmatmul.mubr.f32.gmra.mrb[0].mxu0 %v319
    %v522 = vpop.f32.mrb[0].mxu0
    %v523 = vadd.f32 %v202, %v522
    %v524 = vpop.f32.mrb[0].mxu0
    %525 = vmatprep.mubr.f32.mxu0 0.0
    %526 = vmatmul.mubr.f32.gmra.mrb[0].mxu0 %v322
    %v527 = vpop.f32.mrb[0].mxu0
    %v528 = vadd.f32 %v207, %v527
    %v529 = vpop.f32.mrb[0].mxu0
    %530 = vmatprep.mubr.f32.mxu0 0.0
    %531 = vmatmul.mubr.f32.gmra.mrb[0].mxu0 %v325
    %v532 = vpop.f32.mrb[0].mxu0
    %v533 = vadd.f32 %v212, %v532
    %v534 = vpop.f32.mrb[0].mxu0
    %535 = vmatprep.mubr.f32.mxu0 0.0
    %536 = vmatmul.mubr.f32.gmra.mrb[0].mxu0 %v328
    %v537 = vpop.f32.mrb[0].mxu0
    %v538 = vadd.f32 %v217, %v537
    %v539 = vpop.f32.mrb[0].mxu0
    %540 = vmatprep.mubr.f32.mxu0 0.0
    %541 = vmatmul.mubr.f32.gmra.mrb[0].mxu0 %v331
    %v542 = vpop.f32.mrb[0].mxu0
    %v543 = vadd.f32 %v222, %v542
    %v544 = vpop.f32.mrb[0].mxu0
    %545 = vmatprep.mubr.f32.mxu0 0.0
    %546 = vmatmul.mubr.f32.gmra.mrb[0].mxu0 %v334
    %v547 = vpop.f32.mrb[0].mxu0
    %v548 = vadd.f32 %v227, %v547
    %v549 = vpop.f32.mrb[0].mxu0
    %550 = vmatprep.mubr.f32.mxu0 0.0
    %551 = vmatmul.mubr.f32.gmra.mrb[0].mxu0 %v337
    %v552 = vpop.f32.mrb[0].mxu0
    %v553 = vadd.f32 %v232, %v552
    %v554 = vpop.f32.mrb[0].mxu0
    %555 = vmatprep.mubr.f32.mxu0 0.0
    %556 = vmatmul.mubr.f32.gmra.mrb[0].mxu0 %v340
    %v557 = vpop.f32.mrb[0].mxu0
    %v558 = vadd.f32 %v237, %v557
    %v559 = vpop.f32.mrb[0].mxu0
    %560 = vmatprep.mubr.f32.mxu0 0.0
    %561 = vmatmul.mubr.f32.gmra.mrb[0].mxu0 %v343
    %v562 = vpop.f32.mrb[0].mxu0
    %v563 = vadd.f32 %v242, %v562
    %v564 = vpop.f32.mrb[0].mxu0
    %565 = vmatprep.mubr.f32.mxu0 0.0
    %566 = vmatmul.mubr.f32.gmra.mrb[0].mxu0 %v346
    %v567 = vpop.f32.mrb[0].mxu0
    %v568 = vadd.f32 %v247, %v567
    %v569 = vpop.f32.mrb[0].mxu0
    %570 = vmatprep.mubr.f32.mxu0 0.0
    %571 = vmatmul.mubr.f32.gmra.mrb[0].mxu0 %v349
    %v572 = vpop.f32.mrb[0].mxu0
    %v573 = vadd.f32 %v252, %v572
    %v574 = vpop.f32.mrb[0].mxu0
    %575 = vdwg.mxu0
    %v576 = vmax.f32 %v418, 0.0
    %v577 = vmax.f32 %v423, 0.0
    %v578 = vmax.f32 %v428, 0.0
    %v579 = vmax.f32 %v433, 0.0
    %v580 = vmax.f32 %v438, 0.0
    %v581 = vmax.f32 %v443, 0.0
    %v582 = vmax.f32 %v448, 0.0
    %v583 = vmax.f32 %v453, 0.0
    %v584 = vmax.f32 %v458, 0.0
    %v585 = vmax.f32 %v463, 0.0
    %v586 = vmax.f32 %v468, 0.0
    %v587 = vmax.f32 %v473, 0.0
    %v588 = vmax.f32 %v478, 0.0
    %v589 = vmax.f32 %v483, 0.0
    %v590 = vmax.f32 %v488, 0.0
    %v591 = vmax.f32 %v493, 0.0
    %v592 = vmax.f32 %v498, 0.0
    %v593 = vmax.f32 %v503, 0.0
    %v594 = vmax.f32 %v508, 0.0
    %v595 = vmax.f32 %v513, 0.0
    %v596 = vmax.f32 %v518, 0.0
    %v597 = vmax.f32 %v523, 0.0
    %v598 = vmax.f32 %v528, 0.0
    %v599 = vmax.f32 %v533, 0.0
    %v600 = vmax.f32 %v538, 0.0
    %v601 = vmax.f32 %v543, 0.0
    %v602 = vmax.f32 %v548, 0.0
    %v603 = vmax.f32 %v553, 0.0
    %v604 = vmax.f32 %v558, 0.0
    %v605 = vmax.f32 %v563, 0.0
    %v606 = vmax.f32 %v568, 0.0
    %v607 = vmax.f32 %v573, 0.0
    %v608 = vld [vmem:[%s3] sm:$0xff]
    %v609 = vld [vmem:[%s3 + $0x8] sm:$0xff]
    %v610 = vld [vmem:[%s3 + $0x10] sm:$0xff]
    %v611 = vld [vmem:[%s3 + $0x18] sm:$0xff]
    %v612 = vld [vmem:[%s3 + $0x20] sm:$0xff]
    %v613 = vld [vmem:[%s3 + $0x28] sm:$0xff]
    %v614 = vld [vmem:[%s3 + $0x30] sm:$0xff]
    %v615 = vld [vmem:[%s3 + $0x38] sm:$0xff]
    %v616 = vld [vmem:[%s3 + $0x40] sm:$0xff]
    %v617 = vld [vmem:[%s3 + $0x48] sm:$0xff]
    %v618 = vld [vmem:[%s3 + $0x50] sm:$0xff]
    %v619 = vld [vmem:[%s3 + $0x58] sm:$0xff]
    %v620 = vld [vmem:[%s3 + $0x60] sm:$0xff]
    %v621 = vld [vmem:[%s3 + $0x68] sm:$0xff]
    %v622 = vld [vmem:[%s3 + $0x70] sm:$0xff]
    %v623 = vld [vmem:[%s3 + $0x78] sm:$0xff]
    %v624 = vld [vmem:[%s3 + $0x80] sm:$0xff]
    %v625 = vld [vmem:[%s3 + $0x88] sm:$0xff]
    %v626 = vld [vmem:[%s3 + $0x90] sm:$0xff]
    %v627 = vld [vmem:[%s3 + $0x98] sm:$0xff]
    %v628 = vld [vmem:[%s3 + $0xa0] sm:$0xff]
    %v629 = vld [vmem:[%s3 + $0xa8] sm:$0xff]
    %v630 = vld [vmem:[%s3 + $0xb0] sm:$0xff]
    %v631 = vld [vmem:[%s3 + $0xb8] sm:$0xff]
    %v632 = vld [vmem:[%s3 + $0xc0] sm:$0xff]
    %v633 = vld [vmem:[%s3 + $0xc8] sm:$0xff]
    %v634 = vld [vmem:[%s3 + $0xd0] sm:$0xff]
    %v635 = vld [vmem:[%s3 + $0xd8] sm:$0xff]
    %v636 = vld [vmem:[%s3 + $0xe0] sm:$0xff]
    %v637 = vld [vmem:[%s3 + $0xe8] sm:$0xff]
    %v638 = vld [vmem:[%s3 + $0xf0] sm:$0xff]
    %v639 = vld [vmem:[%s3 + $0xf8] sm:$0xff]
    %v640 = vld [vmem:[%s4] sm:$0xff]
    %v641 = vld [vmem:[%s4 + $0x8] sm:$0xff]
    %v642 = vld [vmem:[%s4 + $0x10] sm:$0xff]
    %v643 = vld [vmem:[%s4 + $0x18] sm:$0xff]
    %v644 = vld [vmem:[%s4 + $0x20] sm:$0xff]
    %v645 = vld [vmem:[%s4 + $0x28] sm:$0xff]
    %v646 = vld [vmem:[%s4 + $0x30] sm:$0xff]
    %v647 = vld [vmem:[%s4 + $0x38] sm:$0xff]
    %v648 = vld [vmem:[%s4 + $0x40] sm:$0xff]
    %v649 = vld [vmem:[%s4 + $0x48] sm:$0xff]
    %v650 = vld [vmem:[%s4 + $0x50] sm:$0xff]
    %v651 = vld [vmem:[%s4 + $0x58] sm:$0xff]
    %v652 = vld [vmem:[%s4 + $0x60] sm:$0xff]
    %v653 = vld [vmem:[%s4 + $0x68] sm:$0xff]
    %v654 = vld [vmem:[%s4 + $0x70] sm:$0xff]
    %v655 = vld [vmem:[%s4 + $0x78] sm:$0xff]
    %657 = vset.pattern.permute.xlu0 0
    %658 = vperm.xlu0 %657, %v640
    %v659 = vpop.permute.xlu0 %658
    %662 = vset.pattern.permute.xlu0 0
    %663 = vperm.xlu0 %662, %v641
    %v664 = vpop.permute.xlu0 %663
    %667 = vset.pattern.permute.xlu0 0
    %668 = vperm.xlu0 %667, %v642
    %v669 = vpop.permute.xlu0 %668
    %672 = vset.pattern.permute.xlu0 0
    %673 = vperm.xlu0 %672, %v643
    %v674 = vpop.permute.xlu0 %673
    %677 = vset.pattern.permute.xlu0 0
    %678 = vperm.xlu0 %677, %v644
    %v679 = vpop.permute.xlu0 %678
    %682 = vset.pattern.permute.xlu0 0
    %683 = vperm.xlu0 %682, %v645
    %v684 = vpop.permute.xlu0 %683
    %687 = vset.pattern.permute.xlu0 0
    %688 = vperm.xlu0 %687, %v646
    %v689 = vpop.permute.xlu0 %688
    %692 = vset.pattern.permute.xlu0 0
    %693 = vperm.xlu0 %692, %v647
    %v694 = vpop.permute.xlu0 %693
    %697 = vset.pattern.permute.xlu0 0
    %698 = vperm.xlu0 %697, %v648
    %v699 = vpop.permute.xlu0 %698
    %702 = vset.pattern.permute.xlu0 0
    %703 = vperm.xlu0 %702, %v649
    %v704 = vpop.permute.xlu0 %703
    %707 = vset.pattern.permute.xlu0 0
    %708 = vperm.xlu0 %707, %v650
    %v709 = vpop.permute.xlu0 %708
    %712 = vset.pattern.permute.xlu0 0
    %713 = vperm.xlu0 %712, %v651
    %v714 = vpop.permute.xlu0 %713
    %717 = vset.pattern.permute.xlu0 0
    %718 = vperm.xlu0 %717, %v652
    %v719 = vpop.permute.xlu0 %718
    %722 = vset.pattern.permute.xlu0 0
    %723 = vperm.xlu0 %722, %v653
    %v724 = vpop.permute.xlu0 %723
    %727 = vset.pattern.permute.xlu0 0
    %728 = vperm.xlu0 %727, %v654
    %v729 = vpop.permute.xlu0 %728
    %732 = vset.pattern.permute.xlu0 0
    %733 = vperm.xlu0 %732, %v655
    %v734 = vpop.permute.xlu0 %733
    %736 = vmatprep.subr.mxu0 0.0
    %737 = vmatpush1.msra.mxu0 %v576
    %738 = vmatprep.subr.mxu0 0.0
    %739 = vmatpush1.msra.mxu0 %v577
    %740 = vmatprep.subr.mxu0 0.0
    %741 = vmatpush1.msra.mxu0 %v578
    %742 = vmatprep.subr.mxu0 0.0
    %743 = vmatpush1.msra.mxu0 %v579
    %744 = vmatprep.subr.mxu0 0.0
    %745 = vmatpush1.msra.mxu0 %v580
    %746 = vmatprep.subr.mxu0 0.0
    %747 = vmatpush1.msra.mxu0 %v581
    %748 = vmatprep.subr.mxu0 0.0
    %749 = vmatpush1.msra.mxu0 %v582
    %750 = vmatprep.subr.mxu0 0.0
    %751 = vmatpush1.msra.mxu0 %v583
    %752 = vmatprep.subr.mxu0 0.0
    %753 = vmatpush1.msra.mxu0 %v584
    %754 = vmatprep.subr.mxu0 0.0
    %755 = vmatpush1.msra.mxu0 %v585
    %756 = vmatprep.subr.mxu0 0.0
    %757 = vmatpush1.msra.mxu0 %v586
    %758 = vmatprep.subr.mxu0 0.0
    %759 = vmatpush1.msra.mxu0 %v587
    %760 = vmatprep.subr.mxu0 0.0
    %761 = vmatpush1.msra.mxu0 %v588
    %762 = vmatprep.subr.mxu0 0.0
    %763 = vmatpush1.msra.mxu0 %v589
    %764 = vmatprep.subr.mxu0 0.0
    %765 = vmatpush1.msra.mxu0 %v590
    %766 = vmatprep.subr.mxu0 0.0
    %767 = vmatpush1.msra.mxu0 %v591
    %768 = vmatprep.subr.mxu0 0.0
    %769 = vmatpush1.msra.mxu0 %v592
    %770 = vmatprep.subr.mxu0 0.0
    %771 = vmatpush1.msra.mxu0 %v593
    %772 = vmatprep.subr.mxu0 0.0
    %773 = vmatpush1.msra.mxu0 %v594
    %774 = vmatprep.subr.mxu0 0.0
    %775 = vmatpush1.msra.mxu0 %v595
    %776 = vmatprep.subr.mxu0 0.0
    %777 = vmatpush1.msra.mxu0 %v596
    %778 = vmatprep.subr.mxu0 0.0
    %779 = vmatpush1.msra.mxu0 %v597
    %780 = vmatprep.subr.mxu0 0.0
    %781 = vmatpush1.msra.mxu0 %v598
    %782 = vmatprep.subr.mxu0 0.0
    %783 = vmatpush1.msra.mxu0 %v599
    %784 = vmatprep.subr.mxu0 0.0
    %785 = vmatpush1.msra.mxu0 %v600
    %786 = vmatprep.subr.mxu0 0.0
    %787 = vmatpush1.msra.mxu0 %v601
    %788 = vmatprep.subr.mxu0 0.0
    %789 = vmatpush1.msra.mxu0 %v602
    %790 = vmatprep.subr.mxu0 0.0
    %791 = vmatpush1.msra.mxu0 %v603
    %792 = vmatprep.subr.mxu0 0.0
    %793 = vmatpush1.msra.mxu0 %v604
    %794 = vmatprep.subr.mxu0 0.0
    %795 = vmatpush1.msra.mxu0 %v605
    %796 = vmatprep.subr.mxu0 0.0
    %797 = vmatpush1.msra.mxu0 %v606
    %798 = vmatprep.subr.mxu0 0.0
    %799 = vmatpush1.msra.mxu0 %v607
    %800 = vmatprep.mubr.f32.mxu0 %v609
    %801 = vmatmul.mubr.f32.gmra.mrb[0].mxu0 %v608
    %v802 = vpop.f32.mrb[0].mxu0
    %v803 = vadd.f32 %v659, %v802
    %v804 = vpop.f32.mrb[0].mxu0
    %805 = vmatprep.mubr.f32.mxu0 %v611
    %806 = vmatmul.mubr.f32.gmra.mrb[0].mxu0 %v610
    %v807 = vpop.f32.mrb[0].mxu0
    %v808 = vadd.f32 %v664, %v807
    %v809 = vpop.f32.mrb[0].mxu0
    %810 = vmatprep.mubr.f32.mxu0 %v613
    %811 = vmatmul.mubr.f32.gmra.mrb[0].mxu0 %v612
    %v812 = vpop.f32.mrb[0].mxu0
    %v813 = vadd.f32 %v669, %v812
    %v814 = vpop.f32.mrb[0].mxu0
    %815 = vmatprep.mubr.f32.mxu0 %v615
    %816 = vmatmul.mubr.f32.gmra.mrb[0].mxu0 %v614
    %v817 = vpop.f32.mrb[0].mxu0
    %v818 = vadd.f32 %v674, %v817
    %v819 = vpop.f32.mrb[0].mxu0
    %820 = vmatprep.mubr.f32.mxu0 %v617
    %821 = vmatmul.mubr.f32.gmra.mrb[0].mxu0 %v616
    %v822 = vpop.f32.mrb[0].mxu0
    %v823 = vadd.f32 %v679, %v822
    %v824 = vpop.f32.mrb[0].mxu0
    %825 = vmatprep.mubr.f32.mxu0 %v619
    %826 = vmatmul.mubr.f32.gmra.mrb[0].mxu0 %v618
    %v827 = vpop.f32.mrb[0].mxu0
    %v828 = vadd.f32 %v684, %v827
    %v829 = vpop.f32.mrb[0].mxu0
    %830 = vmatprep.mubr.f32.mxu0 %v621
    %831 = vmatmul.mubr.f32.gmra.mrb[0].mxu0 %v620
    %v832 = vpop.f32.mrb[0].mxu0
    %v833 = vadd.f32 %v689, %v832
    %v834 = vpop.f32.mrb[0].mxu0
    %835 = vmatprep.mubr.f32.mxu0 %v623
    %836 = vmatmul.mubr.f32.gmra.mrb[0].mxu0 %v622
    %v837 = vpop.f32.mrb[0].mxu0
    %v838 = vadd.f32 %v694, %v837
    %v839 = vpop.f32.mrb[0].mxu0
    %840 = vmatprep.mubr.f32.mxu0 %v625
    %841 = vmatmul.mubr.f32.gmra.mrb[0].mxu0 %v624
    %v842 = vpop.f32.mrb[0].mxu0
    %v843 = vadd.f32 %v699, %v842
    %v844 = vpop.f32.mrb[0].mxu0
    %845 = vmatprep.mubr.f32.mxu0 %v627
    %846 = vmatmul.mubr.f32.gmra.mrb[0].mxu0 %v626
    %v847 = vpop.f32.mrb[0].mxu0
    %v848 = vadd.f32 %v704, %v847
    %v849 = vpop.f32.mrb[0].mxu0
    %850 = vmatprep.mubr.f32.mxu0 %v629
    %851 = vmatmul.mubr.f32.gmra.mrb[0].mxu0 %v628
    %v852 = vpop.f32.mrb[0].mxu0
    %v853 = vadd.f32 %v709, %v852
    %v854 = vpop.f32.mrb[0].mxu0
    %855 = vmatprep.mubr.f32.mxu0 %v631
    %856 = vmatmul.mubr.f32.gmra.mrb[0].mxu0 %v630
    %v857 = vpop.f32.mrb[0].mxu0
    %v858 = vadd.f32 %v714, %v857
    %v859 = vpop.f32.mrb[0].mxu0
    %860 = vmatprep.mubr.f32.mxu0 %v633
    %861 = vmatmul.mubr.f32.gmra.mrb[0].mxu0 %v632
    %v862 = vpop.f32.mrb[0].mxu0
    %v863 = vadd.f32 %v719, %v862
    %v864 = vpop.f32.mrb[0].mxu0
    %865 = vmatprep.mubr.f32.mxu0 %v635
    %866 = vmatmul.mubr.f32.gmra.mrb[0].mxu0 %v634
    %v867 = vpop.f32.mrb[0].mxu0
    %v868 = vadd.f32 %v724, %v867
    %v869 = vpop.f32.mrb[0].mxu0
    %870 = vmatprep.mubr.f32.mxu0 %v637
    %871 = vmatmul.mubr.f32.gmra.mrb[0].mxu0 %v636
    %v872 = vpop.f32.mrb[0].mxu0
    %v873 = vadd.f32 %v729, %v872
    %v874 = vpop.f32.mrb[0].mxu0
    %875 = vmatprep.mubr.f32.mxu0 %v639
    %876 = vmatmul.mubr.f32.gmra.mrb[0].mxu0 %v638
    %v877 = vpop.f32.mrb[0].mxu0
    %v878 = vadd.f32 %v734, %v877
    %v879 = vpop.f32.mrb[0].mxu0
    %880 = vdwg.mxu0
    %v881 = vmax.f32 %v803, 0.0
    %v882 = vmax.f32 %v808, 0.0
    %v883 = vmax.f32 %v813, 0.0
    %v884 = vmax.f32 %v818, 0.0
    %v885 = vmax.f32 %v823, 0.0
    %v886 = vmax.f32 %v828, 0.0
    %v887 = vmax.f32 %v833, 0.0
    %v888 = vmax.f32 %v838, 0.0
    %v889 = vmax.f32 %v843, 0.0
    %v890 = vmax.f32 %v848, 0.0
    %v891 = vmax.f32 %v853, 0.0
    %v892 = vmax.f32 %v858, 0.0
    %v893 = vmax.f32 %v863, 0.0
    %v894 = vmax.f32 %v868, 0.0
    %v895 = vmax.f32 %v873, 0.0
    %v896 = vmax.f32 %v878, 0.0
    %v897 = vld [vmem:[%s5] sm:$0xff]
    %v898 = vld [vmem:[%s5 + $0x8] sm:$0xff]
    %v899 = vld [vmem:[%s5 + $0x10] sm:$0xff]
    %v900 = vld [vmem:[%s5 + $0x18] sm:$0xff]
    %v901 = vld [vmem:[%s5 + $0x20] sm:$0xff]
    %v902 = vld [vmem:[%s5 + $0x28] sm:$0xff]
    %v903 = vld [vmem:[%s5 + $0x30] sm:$0xff]
    %v904 = vld [vmem:[%s5 + $0x38] sm:$0xff]
    %v905 = vld [vmem:[%s5 + $0x40] sm:$0xff]
    %v906 = vld [vmem:[%s5 + $0x48] sm:$0xff]
    %v907 = vld [vmem:[%s5 + $0x50] sm:$0xff]
    %v908 = vld [vmem:[%s5 + $0x58] sm:$0xff]
    %v909 = vld [vmem:[%s5 + $0x60] sm:$0xff]
    %v910 = vld [vmem:[%s5 + $0x68] sm:$0xff]
    %v911 = vld [vmem:[%s5 + $0x70] sm:$0xff]
    %v912 = vld [vmem:[%s5 + $0x78] sm:$0xff]
    %914 = vset.pattern.permute.xlu0 0
    %915 = vperm.xlu0 %914, %v897
    %v916 = vpop.permute.xlu0 %915
    %919 = vset.pattern.permute.xlu0 0
    %920 = vperm.xlu0 %919, %v898
    %v921 = vpop.permute.xlu0 %920
    %924 = vset.pattern.permute.xlu0 0
    %925 = vperm.xlu0 %924, %v899
    %v926 = vpop.permute.xlu0 %925
    %929 = vset.pattern.permute.xlu0 0
    %930 = vperm.xlu0 %929, %v900
    %v931 = vpop.permute.xlu0 %930
    %934 = vset.pattern.permute.xlu0 0
    %935 = vperm.xlu0 %934, %v901
    %v936 = vpop.permute.xlu0 %935
    %939 = vset.pattern.permute.xlu0 0
    %940 = vperm.xlu0 %939, %v902
    %v941 = vpop.permute.xlu0 %940
    %944 = vset.pattern.permute.xlu0 0
    %945 = vperm.xlu0 %944, %v903
    %v946 = vpop.permute.xlu0 %945
    %949 = vset.pattern.permute.xlu0 0
    %950 = vperm.xlu0 %949, %v904
    %v951 = vpop.permute.xlu0 %950
    %954 = vset.pattern.permute.xlu0 0
    %955 = vperm.xlu0 %954, %v905
    %v956 = vpop.permute.xlu0 %955
    %959 = vset.pattern.permute.xlu0 0
    %960 = vperm.xlu0 %959, %v906
    %v961 = vpop.permute.xlu0 %960
    %964 = vset.pattern.permute.xlu0 0
    %965 = vperm.xlu0 %964, %v907
    %v966 = vpop.permute.xlu0 %965
    %969 = vset.pattern.permute.xlu0 0
    %970 = vperm.xlu0 %969, %v908
    %v971 = vpop.permute.xlu0 %970
    %974 = vset.pattern.permute.xlu0 0
    %975 = vperm.xlu0 %974, %v909
    %v976 = vpop.permute.xlu0 %975
    %979 = vset.pattern.permute.xlu0 0
    %980 = vperm.xlu0 %979, %v910
    %v981 = vpop.permute.xlu0 %980
    %984 = vset.pattern.permute.xlu0 0
    %985 = vperm.xlu0 %984, %v911
    %v986 = vpop.permute.xlu0 %985
    %989 = vset.pattern.permute.xlu0 0
    %990 = vperm.xlu0 %989, %v912
    %v991 = vpop.permute.xlu0 %990
    %v993 = vmul.f32 %v916, %v881
    %v994 = vmul.f32 %v921, %v882
    %v995 = vmul.f32 %v926, %v883
    %v996 = vmul.f32 %v931, %v884
    %v997 = vmul.f32 %v936, %v885
    %v998 = vmul.f32 %v941, %v886
    %v999 = vmul.f32 %v946, %v887
    %v1000 = vmul.f32 %v951, %v888
    %v1001 = vmul.f32 %v956, %v889
    %v1002 = vmul.f32 %v961, %v890
    %v1003 = vmul.f32 %v966, %v891
    %v1004 = vmul.f32 %v971, %v892
    %v1005 = vmul.f32 %v976, %v893
    %v1006 = vmul.f32 %v981, %v894
    %v1007 = vmul.f32 %v986, %v895
    %v1008 = vmul.f32 %v991, %v896
    %v1009 = vadd.f32 %v993, %v994
    %v1010 = vadd.f32 %v1009, %v995
    %v1011 = vadd.f32 %v1010, %v996
    %v1012 = vadd.f32 %v1011, %v997
    %v1013 = vadd.f32 %v1012, %v998
    %v1014 = vadd.f32 %v1013, %v999
    %v1015 = vadd.f32 %v1014, %v1000
    %v1016 = vadd.f32 %v1015, %v1001
    %v1017 = vadd.f32 %v1016, %v1002
    %v1018 = vadd.f32 %v1017, %v1003
    %v1019 = vadd.f32 %v1018, %v1004
    %v1020 = vadd.f32 %v1019, %v1005
    %v1021 = vadd.f32 %v1020, %v1006
    %v1022 = vadd.f32 %v1021, %v1007
    %v1023 = vadd.f32 %v1022, %v1008
    %v1024 = vrot.slane %v1023, 4
    %v1025 = vadd.f32 %v1023, %v1024
    %v1026 = vrot.slane %v1025, 2
    %v1027 = vadd.f32 %v1025, %v1026
    %v1028 = vrot.slane %v1027, 1
    %v1029 = vadd.f32 %v1027, %v1028
    %v1030 = vld [vmem:[#allocation2] sm:$0x1]
    %1032 = vset.pattern.permute.xlu0 0
    %1033 = vperm.xlu0 %1032, %v1030
    %v1034 = vpop.permute.xlu0 %1033
    %v1036 = vlaneseq
    %v1037 = vshrl.u32 %v1036, 7
    %v1038 = vsub.s32 0, %v1037
    %v1039 = vrot.slane %v1034, %v1038
    %v1040 = vadd.f32 %v1029, %v1039
    %1041 = vst [vmem:[#allocation3] sm:$0x1] %v1040
    // Predicated region
    $region30: #{tpu_custom_call.1} parent=1 // pred_check
      _
    $region31: #{tpu_custom_call.1} parent=1 // pred_check_branch
      %1043 = sbr.rel (0) target = $region33
    $region32: #{tpu_custom_call.1} parent=1 // pred_region
      %s1045 = ssub.s32 16, 16
      %1046 = vsyncadd [#allocation4], %s1045
      %s1048 = sshll.u32 [#allocation3], 4
      %s1049 = int_to_ptr.vmem [resolvable:$true] %s1048
      %1051 = dma.vmem_to_hbm [thread:$0]  %s1049, 16, %s7, [#allocation4]
    $region33: #{tpu_custom_call.1} parent=1 // pred_fallthru
      _
    // Predicated region
    $region34: #{tpu_custom_call.1} parent=1 // pred_check
      _
    $region35: #{tpu_custom_call.1} parent=1 // pred_check_branch
      %1053 = sbr.rel (0) target = $region37
    $region36: #{tpu_custom_call.1} parent=1 // pred_region
      %1054 = dma.done [#allocation4], 16
    $region37: #{tpu_custom_call.1} parent=1 // pred_fallthru
      _
    %1055 = vsyncpa [#allocation4], 1

</llo_original>
